<compile_context>
chip_gen: v6e
topology: v6e:2x2x1
jax: 0.10.0
libtpu: 0.0.40
codegen_flags: <defaults>
</compile_context>

<pallas_src>
import functools

import jax
import jax.numpy as jnp
from jax.experimental import pallas as pl
from jax.experimental.pallas import tpu as pltpu


def _round_up(v, m):
    return ((v + m - 1) // m) * m


def _sublane_multiple(dtype):
    # f32 -> 8, bf16/f16 -> 16, int8/fp8 -> 32 (sub-32-bit dtypes pack along sublanes).
    return max(8, 32 // jnp.dtype(dtype).itemsize)


def _min_identity(dtype):
    dtype = jnp.dtype(dtype)
    if dtype == jnp.bool_:
        return jnp.array(True, dtype)
    if jnp.issubdtype(dtype, jnp.floating):
        return jnp.array(jnp.inf, dtype)
    return jnp.array(jnp.iinfo(dtype).max, dtype)


def _rule_min_kernel(x_ref, o_ref, *, n_total, block_n, collapse_to_r):
    """Running-min accumulation over the trailing ('arbitrary') grid axis.

    x_ref: (TB, TN, L) input block; o_ref: (TB, R) output block, resident across the
    reduction axis. When collapse_to_r is set, L == 128 holds R-periodic data and the
    128/R lane groups are folded with roll+min before the store.
    """
    n_idx = pl.program_id(1)
    ident = _min_identity(o_ref.dtype)

    def tile_min(x):
        m = jnp.min(x, axis=1)                      # (TB, L)
        if collapse_to_r is not None:
            lanes = m.shape[-1]                     # always 128 on this path
            shift = collapse_to_r
            while shift < lanes:
                m = jnp.minimum(m, pltpu.roll(m, shift=shift, axis=1))
                shift *= 2
            m = m[:, :collapse_to_r]                # (TB, R)
        return m

    @pl.when(n_idx == 0)
    def _():
        o_ref[...] = jnp.full(o_ref.shape, ident, o_ref.dtype)

    if n_total % block_n != 0:
        # Ragged reduction tail: only the final block holds out-of-range rows, so the
        # iota/compare/select cost is gated to that single grid step.
        last = pl.num_programs(1) - 1

        @pl.when(n_idx != last)
        def _():
            o_ref[...] = jnp.minimum(o_ref[...], tile_min(x_ref[...]))

        @pl.when(n_idx == last)
        def _():
            pos = jax.lax.broadcasted_iota(jnp.int32, (1, block_n, 1), 1)
            valid = (n_idx * block_n + pos) < n_total
            o_ref[...] = jnp.minimum(
                o_ref[...], tile_min(jnp.where(valid, x_ref[...], ident)))
    else:
        o_ref[...] = jnp.minimum(o_ref[...], tile_min(x_ref[...]))


def _prefer_divisor(n, cap, sub):
    """Largest tile <= cap that is a multiple of `sub` and divides n, unless that
    would shrink the tile by more than 2x (the gated in-kernel mask handles tails)."""
    if cap >= n or n % cap == 0:
        return cap
    d = (cap // sub) * sub
    while d >= sub:
        if n % d == 0:
            break
        d -= sub
    if d >= max(sub, cap // 2):
        return d
    return cap


def _pick_tiles(B, N, R, dtype, target_bytes, min_batch_tiles):
    """Pick (tb, tn) so the VMEM-padded (tb, tn, R) input block is ~target_bytes."""
    itemsize = jnp.dtype(dtype).itemsize
    sub = _sublane_multiple(dtype)
    r_pad = _round_up(R, 128)

    def blk_bytes(tb, tn):
        return tb * _round_up(tn, sub) * r_pad * itemsize

    # Cap tb so the 'parallel' batch axis has >= min_batch_tiles grid steps when B is
    # big enough — lets both v7x TensorCores stream HBM; no-op on 1-TC v5e/v6e.
    tb_max = B
    if min_batch_tiles > 1 and B >= min_batch_tiles * sub:
        tb_max = _round_up(pl.cdiv(B, min_batch_tiles), sub)

    if N <= sub or blk_bytes(min(B, sub), N) <= target_bytes:
        # Whole membership axis in one block; tile only the batch axis.
        tn = N
        rows = max(1, target_bytes // blk_bytes(1, N))
        if B <= rows and B <= tb_max:
            tb = B
        else:
            tb = max(sub, (min(rows, tb_max) // sub) * sub)
            if tb >= B:
                tb = B
    else:
        # Membership axis is large: minimal batch tile, stream N in chunks.
        tb = B if B <= sub else sub
        chunks = max(1, target_bytes // blk_bytes(tb, sub))
        tn = min(N, chunks * sub)
        tn = _prefer_divisor(N, tn, sub)
    return int(tb), int(tn)


def _legalize_tile(t, full, sub):
    t = max(1, int(t))
    if t >= full:
        return full
    if t % sub != 0:
        t = max(sub, (t // sub) * sub)
    return min(t, full)


def rule_layer(x: jax.Array,
               *,
               block_b: int | None = None,
               block_n: int | None = None,
               force_pallas: bool = False,
               target_block_bytes: int = 8 * 1024 * 1024,
               small_input_bytes: int = 1 * 1024 * 1024,
               min_batch_tiles: int = 2) -> jax.Array:
    """Pallas implementation of _RuleLayer.forward: min over axis 1.

    x: (B, N, R) array -> returns (B, R).
    """
    B, N, R = x.shape
    dtype = x.dtype
    itemsize = jnp.dtype(dtype).itemsize
    sub = _sublane_multiple(dtype)
    total_bytes = B * N * R * itemsize

    # Fast path: for tiny inputs the pallas_call launch/grid overhead dwarfs the work.
    if total_bytes < small_input_bytes and not force_pallas:
        return jnp.min(x, axis=1)

    # Lane-dense path for narrow rule dims: view the (N, R) tail as full 128-lane rows
    # so no vreg/VMEM lane padding (or 128-byte DMA slivers) is paid.
    lane_dense = (R < 128) and (128 % R == 0) and ((N * R) % 128 == 0) and (N * R >= 128)
    if lane_dense:
        n_eff = (N * R) // 128
        r_eff = 128
        x_eff = x.reshape(B, n_eff, r_eff)          # contiguous -> free reshape
        collapse = R
    else:
        n_eff, r_eff, x_eff, collapse = N, R, x, None

    # Keep auto-picked blocks modest so double-buffered blocks fit every generation's
    # scoped VMEM (v7x only has 64 MiB physical).
    target = min(int(target_block_bytes), 16 * 1024 * 1024)
    tb, tn = _pick_tiles(B, n_eff, r_eff, dtype, target, min_batch_tiles)
    if block_b is not None:
        tb = _legalize_tile(block_b, B, sub)
    if block_n is not None:
        tn = _legalize_tile(block_n, n_eff, sub)

    grid = (pl.cdiv(B, tb), pl.cdiv(n_eff, tn))
    kernel = functools.partial(_rule_min_kernel, n_total=n_eff, block_n=tn,
                               collapse_to_r=collapse)

    # Scoped-VMEM budget derived from the real double-buffered footprint (+ slack).
    in_blk = tb * _round_up(tn, sub) * _round_up(r_eff, 128) * itemsize
    out_blk = _round_up(tb, sub) * _round_up(R, 128) * itemsize
    vmem_limit = int(max(2 * (in_blk + out_blk) + (4 << 20), 16 << 20))

    return pl.pallas_call(
        kernel,
        out_shape=jax.ShapeDtypeStruct((B, R), dtype),
        grid_spec=pltpu.PrefetchScalarGridSpec(
            num_scalar_prefetch=0,
            grid=grid,
            in_specs=[pl.BlockSpec((tb, tn, r_eff), lambda b, n: (b, n, 0))],
            out_specs=pl.BlockSpec((tb, R), lambda b, n: (b, 0)),
        ),
        compiler_params=pltpu.CompilerParams(
            dimension_semantics=("parallel", "arbitrary"),
            vmem_limit_bytes=vmem_limit,
        ),
        cost_estimate=pl.CostEstimate(
            flops=B * N * R,
            transcendentals=0,
            bytes_accessed=(B * N * R + B * R) * itemsize,
        ),
    )(x_eff)


if __name__ == "__main__":
    key = jax.random.PRNGKey(0)
    k1, k2, k3 = jax.random.split(key, 3)

    # 1) Tiny module-scale shape (batch=2, memberships=4, rules=32): XLA fast path.
    B, N, R = 2, 4, 32
    x_small = jax.random.uniform(k1, (B, N, R), dtype=jnp.float32)
    ref_small = jnp.min(x_small, axis=1)
    out_small = jax.block_until_ready(rule_layer(x_small))
    assert out_small.shape == (B, R), out_small.shape
    assert jnp.allclose(out_small, ref_small), "fast path mismatch vs reference"

    # 2) Same tiny shape forced through Pallas: exercises the lane-dense (R<128)
    #    path with a single 128-lane group and the roll+min collapse.
    out_small_p = jax.block_until_ready(rule_layer(x_small, force_pallas=True))
    assert jnp.allclose(out_small_p, ref_small), "pallas lane-dense (1 group) mismatch"

    # 3) Lane-dense path with multiple lane groups (N*R = 384 -> 3 rows of 128 lanes)
    #    and two batch tiles on the parallel grid axis.
    B3, N3, R3 = 32, 12, 32
    x_ld = jax.random.uniform(k3, (B3, N3, R3), dtype=jnp.float32)
    out_ld = jax.block_until_ready(rule_layer(x_ld, force_pallas=True))
    assert jnp.allclose(out_ld, jnp.min(x_ld, axis=1)), "pallas lane-dense mismatch"

    # 4) Wide-R tiled path with ragged batch (60 % 16 != 0) and ragged membership
    #    (20 % 8 != 0) tails: exercises the pl.when-gated tail mask and the discarded
    #    out-of-range output rows on the batch axis.
    B2, N2, R2 = 60, 20, 256
    x_big = jax.random.uniform(k2, (B2, N2, R2), dtype=jnp.float32)
    out_big = jax.block_until_ready(
        rule_layer(x_big, block_b=16, block_n=8, force_pallas=True))
    assert out_big.shape == (B2, R2), out_big.shape
    assert jnp.allclose(out_big, jnp.min(x_big, axis=1)), "pallas tiled/masked mismatch"

    # 5) Same wide-R input with auto-picked tiling (no overrides): whole-N block,
    #    batch tile capped so the parallel axis has two grid steps.
    out_auto = jax.block_until_ready(rule_layer(x_big, force_pallas=True))
    assert jnp.allclose(out_auto, jnp.min(x_big, axis=1)), "pallas auto-tiling mismatch"

    print("KERNEL_OK")
</pallas_src>

<mosaic_0001>
module attributes {stable_mosaic.version = 11 : i64} {
  func.func @_rule_min_kernel(%arg0: i32, %arg1: i32, %arg2: memref<2x1x128xf32, #tpu.memory_space<vmem>>, %arg3: memref<2x32xf32, #tpu.memory_space<vmem>>) attributes {dimension_semantics = [#tpu.dimension_semantics<parallel>, #tpu.dimension_semantics<arbitrary>], iteration_bounds = array<i64: 1, 1>, scalar_prefetch = 0 : i64, scratch_operands = 0 : i64, tpu.core_type = #tpu.core_type<tc>, window_params = [{transform_indices = @transform_0, window_bounds = array<i64: 2, 1, 128>}, {transform_indices = @transform_1, window_bounds = array<i64: 2, 32>}]} {
    %c0_i32 = arith.constant 0 : i32
    %0 = arith.cmpi eq, %arg1, %c0_i32 : i32
    %1 = arith.extui %0 : i1 to i32
    %cst = arith.constant 0x7F800000 : f32
    %c0_i32_0 = arith.constant 0 : i32
    %2 = arith.cmpi ne, %1, %c0_i32_0 : i32
    scf.if %2 {
      %13 = vector.broadcast %cst : f32 to vector<2x32xf32>
      %c0_8 = arith.constant 0 : index
      %c0_9 = arith.constant 0 : index
      %14 = vector.load %arg3[%c0_8, %c0_9] : memref<2x32xf32, #tpu.memory_space<vmem>>, vector<2x32xf32>
      tpu.vector_store %arg3[%c0_8, %c0_9], %13 {strides = array<i32>} : memref<2x32xf32, #tpu.memory_space<vmem>>, vector<2x32xf32>,
    } else {
    }
    %c0 = arith.constant 0 : index
    %c0_1 = arith.constant 0 : index
    %3 = vector.load %arg3[%c0, %c0_1] : memref<2x32xf32, #tpu.memory_space<vmem>>, vector<2x32xf32>
    %c0_2 = arith.constant 0 : index
    %c0_3 = arith.constant 0 : index
    %c0_4 = arith.constant 0 : index
    %4 = vector.load %arg2[%c0_2, %c0_3, %c0_4] : memref<2x1x128xf32, #tpu.memory_space<vmem>>, vector<2x1x128xf32>
    %cst_5 = arith.constant dense<0x7F800000> : vector<2x128xf32>
    %5 = vector.multi_reduction <minimumf>, %4, %cst_5 [1] : vector<2x1x128xf32> to vector<2x128xf32>
    %c32_i32 = arith.constant 32 : i32
    %6 = tpu.dynamic_rotate %5 by %c32_i32 dim 1 : vector<2x128xf32>, i32 -> vector<2x128xf32>
    %7 = arith.minimumf %5, %6 : vector<2x128xf32>
    %c64_i32 = arith.constant 64 : i32
    %8 = tpu.dynamic_rotate %7 by %c64_i32 dim 1 : vector<2x128xf32>, i32 -> vector<2x128xf32>
    %9 = arith.minimumf %7, %8 : vector<2x128xf32>
    %10 = vector.extract_strided_slice %9 {offsets = [0, 0], sizes = [2, 32], strides = [1, 1]} : vector<2x128xf32> to vector<2x32xf32>
    %11 = arith.minimumf %3, %10 : vector<2x32xf32>
    %c0_6 = arith.constant 0 : index
    %c0_7 = arith.constant 0 : index
    %12 = vector.load %arg3[%c0_6, %c0_7] : memref<2x32xf32, #tpu.memory_space<vmem>>, vector<2x32xf32>
    tpu.vector_store %arg3[%c0_6, %c0_7], %11 {strides = array<i32>} : memref<2x32xf32, #tpu.memory_space<vmem>>, vector<2x32xf32>,
    return
  }
  func.func @transform_0(%arg0: i32, %arg1: i32) -> (i32, i32, i32) {
    %c0_i32 = arith.constant 0 : i32
    %c0_i32_0 = arith.constant 0 : i32
    return %arg0, %arg1, %c0_i32 : i32, i32, i32
  }
  func.func @transform_1(%arg0: i32, %arg1: i32) -> (i32, i32) {
    %c0_i32 = arith.constant 0 : i32
    %c0_i32_0 = arith.constant 0 : i32
    return %arg0, %c0_i32 : i32, i32
  }
}

</mosaic_0001>

<llo_original>
// kernel: tpu_custom_call.1
$region0: #{tpu_custom_call.1}
  #allocation0 [shape = 'u32[]', space=smem, size = 0x4, offset = 0x4, fixed_abs, tag = 'smem constant byte address 0x4 - core index']
  #allocation1 [shape = 'u32[144,128]{1,0:T(1,128)}', space=vmem, size = 0x12000, scoped, tag = 'internal scratch']
  %s0 = inlined_call_operand.hbm [shape: f32[2,1,128], index: 0, kind: input, shape index: {}]
  %s1 = inlined_call_operand.hbm [shape: f32[2,32], index: 1, kind: output, shape index: {}]
  %s2 = sld [smem:[#allocation0]]
  $region22: #{tpu_custom_call.1} parent=0
    _
  %s4 = ssub.s32 1, %s2
  %s5 = scalar_select 0, %s4, %s2
  $region1: #{tpu_custom_call.1} parent=0
    #allocation2 [shape = 'u8[1024]{0}', space=vmem, size = 0x400, scoped, tag = 'input window, operand 0, single buffered']
    #allocation3 [shape = 's32[1]{0}', space=sflag, size = 0x4, scoped, tag = 'scoped memory for tpu_custom_call.1']
    #allocation4 [shape = 's32[1]{0}', space=sflag, size = 0x4, scoped, tag = 'scoped memory for tpu_custom_call.1']
    #allocation5 [shape = 'u8[1024]{0}', space=vmem, size = 0x400, scoped, tag = 'output window, operand 0, single buffered']
    %6 = vsyncpa [#allocation3], 0
    %7 = vsyncpa [#allocation4], 0
    // Predicated region
    $region2: #{tpu_custom_call.1} parent=1 // pred_check
      _
    $region3: #{tpu_custom_call.1} parent=1 // pred_check_branch
      %9 = sbr.rel (0) target = $region5
    $region4: #{tpu_custom_call.1} parent=1 // pred_region
      %s11 = ssub.s32 32, 32
      %12 = vsyncadd [#allocation3], %s11
      %s13 = sshll.u32 [#allocation2], 4
      %s14 = int_to_ptr.vmem [resolvable:$true] %s13
      %19 = dma.hbm_to_vmem [thread:$0]  %s0, 32, %s14, [#allocation3], 16, 16, 1
    $region5: #{tpu_custom_call.1} parent=1 // pred_fallthru
      _
    // Predicated region
    $region6: #{tpu_custom_call.1} parent=1 // pred_check
      _
    $region7: #{tpu_custom_call.1} parent=1 // pred_check_branch
      %21 = sbr.rel (0) target = $region9
    $region8: #{tpu_custom_call.1} parent=1 // pred_region
      %22 = dma.done [#allocation3], 32
    $region9: #{tpu_custom_call.1} parent=1 // pred_fallthru
      _
    %p23 = scmp.eq.s32.totalorder 0, 0
    // Predicated region
    $region10: #{tpu_custom_call.1} parent=1 // pred_check
      %p24 = pneg %p23
    $region11: #{tpu_custom_call.1} parent=1 // pred_check_branch
      %26 = sbr.rel (%p24) target = $region13
    $region12: #{tpu_custom_call.1} parent=1 // pred_region
      %vm27 = vcmask 254976
      %28 = vst.msk [vmem:[#allocation5] sm:$0x3] %vm27, inf
    $region13: #{tpu_custom_call.1} parent=1 // pred_fallthru
      _
    %v29 = vld [vmem:[#allocation5] sm:$0x3]
    %v30 = vld [vmem:[#allocation2] sm:$0x1]
    %v31 = vld [vmem:[#allocation2 + $0x1] sm:$0x1]
    %v34 = vcombine.low %v30, %v31
    %v36 = vunpack.c.l.s4 1966171168
    %v37 = vunpack.c.0.s8 %v36
    %v38 = vlaneseq
    %v39 = vshrl.u32 %v38, 7
    %v40 = vsub.s32 %v37, %v39
    %v41 = vrot.slane %v34, %v40
    %v43 = vunpack.c.l.s4 1966171168
    %v44 = vunpack.c.0.s8 %v43
    %v45 = vlaneseq
    %v46 = vshrl.u32 %v45, 7
    %v47 = vsub.s32 %v44, %v46
    %v48 = vrot.slane %v41, %v47
    %50 = vrot.lane.b32.xlu0 %v48, 32
    %v51 = vpop.permute.xlu0 %50
    %v54 = vunpack.c.l.s4 1966171168
    %v55 = vunpack.c.0.s8 %v54
    %v56 = vlaneseq
    %v57 = vshrl.u32 %v56, 7
    %v58 = vsub.s32 %v55, %v57
    %v59 = vrot.slane %v51, %v58
    %v60 = vcombine.high %v59, %v59
    %v62 = vunpack.c.l.s4 1966171168
    %v63 = vunpack.c.0.s8 %v62
    %v64 = vlaneseq
    %v65 = vshrl.u32 %v64, 7
    %v66 = vsub.s32 %v63, %v65
    %v67 = vrot.slane %v59, %v66
    %v69 = vunpack.c.l.s4 1966171168
    %v70 = vunpack.c.0.s8 %v69
    %v71 = vlaneseq
    %v72 = vshrl.u32 %v71, 7
    %v73 = vsub.s32 %v70, %v72
    %v74 = vrot.slane %v60, %v73
    %v77 = vmin.f32 %v30, %v67
    %v78 = vmin.f32 %v31, %v74
    %v81 = vcombine.low %v77, %v78
    %v83 = vunpack.c.l.s4 1966171168
    %v84 = vunpack.c.0.s8 %v83
    %v85 = vlaneseq
    %v86 = vshrl.u32 %v85, 7
    %v87 = vsub.s32 %v84, %v86
    %v88 = vrot.slane %v81, %v87
    %v90 = vunpack.c.l.s4 1966171168
    %v91 = vunpack.c.0.s8 %v90
    %v92 = vlaneseq
    %v93 = vshrl.u32 %v92, 7
    %v94 = vsub.s32 %v91, %v93
    %v95 = vrot.slane %v88, %v94
    %97 = vrot.lane.b32.xlu0 %v95, 64
    %v98 = vpop.permute.xlu0 %97
    %v101 = vunpack.c.l.s4 1966171168
    %v102 = vunpack.c.0.s8 %v101
    %v103 = vlaneseq
    %v104 = vshrl.u32 %v103, 7
    %v105 = vsub.s32 %v102, %v104
    %v106 = vrot.slane %v98, %v105
    %v107 = vcombine.high %v106, %v106
    %v109 = vunpack.c.l.s4 1966171168
    %v110 = vunpack.c.0.s8 %v109
    %v111 = vlaneseq
    %v112 = vshrl.u32 %v111, 7
    %v113 = vsub.s32 %v110, %v112
    %v114 = vrot.slane %v106, %v113
    %v116 = vunpack.c.l.s4 1966171168
    %v117 = vunpack.c.0.s8 %v116
    %v118 = vlaneseq
    %v119 = vshrl.u32 %v118, 7
    %v120 = vsub.s32 %v117, %v119
    %v121 = vrot.slane %v107, %v120
    %v124 = vmin.f32 %v77, %v114
    %v125 = vmin.f32 %v78, %v121
    %v128 = vcombine.low %v124, %v125
    %v130 = vunpack.c.l.s4 1966171168
    %v131 = vunpack.c.0.s8 %v130
    %v132 = vlaneseq
    %v133 = vshrl.u32 %v132, 7
    %v134 = vsub.s32 %v131, %v133
    %v135 = vrot.slane %v128, %v134
    %v137 = vunpack.c.l.s4 1966171168
    %v138 = vunpack.c.0.s8 %v137
    %v139 = vlaneseq
    %v140 = vshrl.u32 %v139, 7
    %v141 = vsub.s32 %v138, %v140
    %v142 = vrot.slane %v135, %v141
    %v144 = vmin.f32 %v29, %v142
    %vm145 = vcmask 254976
    %146 = vst.msk [vmem:[#allocation5] sm:$0x3] %vm145, %v144
    // Predicated region
    $region14: #{tpu_custom_call.1} parent=1 // pred_check
      _
    $region15: #{tpu_custom_call.1} parent=1 // pred_check_branch
      %148 = sbr.rel (0) target = $region17
    $region16: #{tpu_custom_call.1} parent=1 // pred_region
      %s150 = ssub.s32 32, 32
      %151 = vsyncadd [#allocation4], %s150
      %s153 = sshll.u32 [#allocation5], 4
      %s154 = int_to_ptr.vmem [resolvable:$true] %s153
      %156 = dma.vmem_to_hbm [thread:$0]  %s154, 32, %s1, [#allocation4]
    $region17: #{tpu_custom_call.1} parent=1 // pred_fallthru
      _
    // Predicated region
    $region18: #{tpu_custom_call.1} parent=1 // pred_check
      _
    $region19: #{tpu_custom_call.1} parent=1 // pred_check_branch
      %158 = sbr.rel (0) target = $region21
    $region20: #{tpu_custom_call.1} parent=1 // pred_region
      %159 = dma.done [#allocation4], 32
    $region21: #{tpu_custom_call.1} parent=1 // pred_fallthru
      _
    %160 = vsyncpa [#allocation3], 1
    %161 = vsyncpa [#allocation4], 1

</llo_original>
